<compile_context>
chip_gen: v7x
topology: tpu7x:2x2x1
jax: 0.10.0
libtpu: 0.0.40
codegen_flags: <defaults>
</compile_context>

<pallas_src>
import jax
import jax.numpy as jnp
import numpy as np
from jax.experimental import pallas as pl
from jax.experimental.pallas import tpu as pltpu


# ----------------------- config (small synthetic shapes) -----------------------
B = 2                 # batch
S = 8                 # sequence length
HIDDEN_SZ = 32        # args.hidden_sz (RoBERTa pooled feature size)
IMG_HIDDEN_SZ = 16    # args.img_hidden_sz
NUM_IMAGE_EMBEDS = 4  # args.num_image_embeds
N_CLASSES = 4         # args.n_classes
VOCAB = 64            # synthetic vocab for the embedding table
IMG_FLAT = IMG_HIDDEN_SZ * NUM_IMAGE_EMBEDS                 # 64
LAST_SIZE = HIDDEN_SZ + IMG_FLAT                            # 96
C_PAD = 128           # lane-dense padded class dimension
V_PAD = 128           # lane-dense padded vocab dimension

# weight-slab row layout (all section starts are multiples of 16 for bf16 packing)
ROW_EMB = 0                       # emb_pb = emb @ Wp + bp        : rows [0, 128)
ROW_WT = ROW_EMB + V_PAD          # classifier txt slice (padded) : rows [128, 256)
ROW_WI = ROW_WT + C_PAD           # classifier img slice          : rows [256, 320)
ROW_BC = ROW_WI + IMG_FLAT        # classifier bias               : row  320
SLAB_ROWS = 336                   # 321 padded up to a multiple of 16


# ------------------------------- Pallas kernel ---------------------------------
def fused_clf_kernel(tok_ref, mask_ref, img_ref, slab_ref, out_ref):
    """Fused: embedding gather -> masked-mean pool -> (folded) pooler tanh -> classifier.

    tok_ref : (Bp, S)          int32 token ids (batch zero-padded to sublane multiple)
    mask_ref: (Bp, S)          f32 attention mask
    img_ref : (Bp, IMG_FLAT)   f32 flattened image features
    slab_ref: (SLAB_ROWS, 128) packed weight slab (f32 or bf16)
    out_ref : (Bp, C_PAD)      f32 lane-dense logits tile
    """
    Bp, Ss = tok_ref.shape
    wdt = slab_ref.dtype

    # ---- masked-mean weights (VPU math in f32; exact reciprocal per review) ----
    mask = mask_ref[...]                                       # (Bp, S)
    denom = jnp.sum(mask, axis=1, keepdims=True)               # (Bp, 1)
    # guard: fully-padded rows give 0 weights (reference would give NaN) -- intentional.
    w = mask / jnp.maximum(denom, 1.0)                         # (Bp, S), rows sum to 1

    # ---- fused embedding gather + masked mean: weighted one-hot counts (VPU),
    #      then a single MXU matmul with the pooler-folded table.
    tok = tok_ref[...]                                         # (Bp, S) int32
    vocab_iota = jax.lax.broadcasted_iota(jnp.int32, (Bp, Ss, V_PAD), 2)
    counts = jnp.sum(
        jnp.where(tok[:, :, None] == vocab_iota, w[:, :, None], 0.0),
        axis=1)                                                # (Bp, V_PAD) f32

    # pooler dense + bias are pre-folded into the emb rows (exact since counts rows
    # sum to 1 for any row with >= 1 unmasked token).  Columns >= HIDDEN_SZ are zero,
    # so tanh(0)=0 there and the zero-padded Wt rows make them inert below.
    emb_pb = slab_ref[ROW_EMB:ROW_EMB + V_PAD, :]              # (V_PAD, C_PAD)
    txt_feat = jnp.tanh(
        jnp.dot(counts.astype(wdt), emb_pb,
                preferred_element_type=jnp.float32))           # (Bp, C_PAD) f32

    # classifier on concat([txt_feat, img_flat]):
    #   [txt, img] @ [Wt; Wi] + b == txt @ Wt + img @ Wi + b   (lane-dense 128-col tiles)
    wt = slab_ref[ROW_WT:ROW_WT + C_PAD, :]                    # (C_PAD, C_PAD), rows >= H zero
    wi = slab_ref[ROW_WI:ROW_WI + IMG_FLAT, :]                 # (IMG_FLAT, C_PAD)
    bc = slab_ref[ROW_BC:ROW_BC + 1, :].astype(jnp.float32)    # (1, C_PAD)

    logits = (
        jnp.dot(txt_feat.astype(wdt), wt, preferred_element_type=jnp.float32)
        + jnp.dot(img_ref[...].astype(wdt), wi, preferred_element_type=jnp.float32)
        + bc
    )                                                          # (Bp, C_PAD) f32
    out_ref[...] = logits.astype(out_ref.dtype)


# ------------------------------ param preparation -------------------------------
def prepare_params(params, weight_dtype=jnp.bfloat16):
    """One-time packing of all constant weights into a single lane-dense slab.

    weight_dtype=bf16 is the production default for v6e/v7x (native bf16 MXU, f32
    accumulate, half the DMA bytes).  Note: do NOT int8-quantize this slab for v7x
    (its MXU has no int path -- bf16/fp8 only).
    """
    hp = jax.lax.Precision.HIGHEST
    H = HIDDEN_SZ
    # Fold the RoBERTa pooler dense + bias into the embedding table.
    emb_pb = (jnp.dot(params["emb_table"], params["pooler_w"], precision=hp)
              + params["pooler_b"])                            # (VOCAB, H)

    wc, bcl = params["clf_w"], params["clf_b"]
    slab = jnp.zeros((SLAB_ROWS, C_PAD), jnp.float32)
    slab = slab.at[ROW_EMB:ROW_EMB + VOCAB, :H].set(emb_pb)
    slab = slab.at[ROW_WT:ROW_WT + H, :N_CLASSES].set(wc[:H, :])
    slab = slab.at[ROW_WI:ROW_WI + IMG_FLAT, :N_CLASSES].set(wc[H:, :])
    slab = slab.at[ROW_BC, :N_CLASSES].set(bcl[0])
    return {"slab": slab.astype(weight_dtype)}


# ---------------------------------- wrapper --------------------------------------
def multimodal_concat_bert_clf(txt, mask, segment, img, prepared):
    """Mirrors MultimodalConcatBertClf.forward (RoBERTa ignores token_type_ids)."""
    del segment
    Bsz = txt.shape[0]
    Bp = ((Bsz + 7) // 8) * 8          # pad batch to full sublanes -> unmasked vst

    # torch.flatten(img, start_dim=1) + zero-padding of batch rows: pure layout
    # plumbing kept host-side (fused by jit); padded rows are sliced off below.
    img_flat = img.reshape(Bsz, -1)                                  # (B, IMG_FLAT)
    tok_p = jnp.zeros((Bp, txt.shape[1]), jnp.int32).at[:Bsz].set(txt)
    mask_p = jnp.zeros((Bp, mask.shape[1]), jnp.float32).at[:Bsz].set(mask)
    img_p = jnp.zeros((Bp, img_flat.shape[1]), jnp.float32).at[:Bsz].set(img_flat)

    slab = prepared["slab"]
    vmem = pl.BlockSpec(memory_space=pltpu.MemorySpace.VMEM)

    Ss = tok_p.shape[1]
    flops = 2 * Bp * (Ss * V_PAD            # one-hot select + seq reduce (approx)
                      + V_PAD * C_PAD       # counts @ emb_pb
                      + C_PAD * C_PAD       # txt_feat @ Wt
                      + IMG_FLAT * C_PAD)   # img @ Wi
    transcendentals = Bp * C_PAD            # tanh
    bytes_accessed = (tok_p.size * 4 + mask_p.size * 4 + img_p.size * 4
                      + slab.size * slab.dtype.itemsize + Bp * C_PAD * 4)

    # No grid at these toy shapes (dispatch/DMA-latency bound).  TODO(synk): at real
    # RoBERTa-large shapes add a batch-tiled grid (dimension_semantics=("parallel",)),
    # keep the embedding table HBM-resident with a scalar-prefetch/DMA gather, and
    # re-derive tile sizes for v7x's 64 MiB VMEM.
    out_pad = pl.pallas_call(
        fused_clf_kernel,
        out_shape=jax.ShapeDtypeStruct((Bp, C_PAD), jnp.float32),
        in_specs=[vmem] * 4,
        out_specs=vmem,
        cost_estimate=pl.CostEstimate(
            flops=flops,
            transcendentals=transcendentals,
            bytes_accessed=bytes_accessed,
        ),
    )(tok_p, mask_p, img_p, slab)

    return out_pad[:Bsz, :N_CLASSES]


# ------------------------------- reference (jnp) ---------------------------------
def reference_forward(txt, mask, segment, img, params):
    del segment
    hp = jax.lax.Precision.HIGHEST
    tok_emb = jnp.take(params["emb_table"], txt, axis=0)
    pooled_in = (jnp.sum(tok_emb * mask[:, :, None], axis=1)
                 / jnp.sum(mask, axis=1, keepdims=True))
    txt_feat = jnp.tanh(jnp.dot(pooled_in, params["pooler_w"], precision=hp)
                        + params["pooler_b"])
    img_flat = img.reshape(img.shape[0], -1)
    cat = jnp.concatenate([txt_feat, img_flat], axis=-1)
    return jnp.dot(cat, params["clf_w"], precision=hp) + params["clf_b"]


# ------------------------------------ main ----------------------------------------
if __name__ == "__main__":
    key = jax.random.PRNGKey(0)
    k_emb, k_wp, k_bp, k_wc, k_bc, k_txt, k_img = jax.random.split(key, 7)

    params = {
        "emb_table": jax.random.normal(k_emb, (VOCAB, HIDDEN_SZ), jnp.float32) * 0.02,
        "pooler_w": jax.random.normal(k_wp, (HIDDEN_SZ, HIDDEN_SZ), jnp.float32) * 0.05,
        "pooler_b": jax.random.normal(k_bp, (1, HIDDEN_SZ), jnp.float32) * 0.01,
        "clf_w": jax.random.normal(k_wc, (LAST_SIZE, N_CLASSES), jnp.float32) * 0.05,
        "clf_b": jax.random.normal(k_bc, (1, N_CLASSES), jnp.float32) * 0.01,
    }

    txt = jax.random.randint(k_txt, (B, S), 0, VOCAB, dtype=jnp.int32)
    mask = jnp.ones((B, S), jnp.float32).at[:, S - 2:].set(0.0)  # last 2 tokens padded
    segment = jnp.zeros((B, S), jnp.int32)
    img = jax.random.normal(k_img, (B, NUM_IMAGE_EMBEDS, IMG_HIDDEN_SZ), jnp.float32)

    ref = reference_forward(txt, mask, segment, img, params)
    fwd = jax.jit(multimodal_concat_bert_clf)

    # f32 weight slab: semantic check against the module reference.
    # Tolerance covers MXU f32 pass-decomposition / summation-order differences.
    prep32 = jax.tree_util.tree_map(jax.block_until_ready,
                                    prepare_params(params, weight_dtype=jnp.float32))
    out32 = jax.block_until_ready(fwd(txt, mask, segment, img, prep32))
    assert out32.shape == (B, N_CLASSES)
    np.testing.assert_allclose(np.asarray(out32), np.asarray(ref), rtol=5e-3, atol=5e-3)

    # bf16 weight slab (production default on v6e/v7x: half the weight DMA bytes).
    # Looser tolerance accounts for bf16 quantization of weights / MXU operands.
    prep16 = jax.tree_util.tree_map(jax.block_until_ready, prepare_params(params))
    out16 = jax.block_until_ready(fwd(txt, mask, segment, img, prep16))
    np.testing.assert_allclose(np.asarray(out16), np.asarray(ref), rtol=2e-2, atol=2e-2)

    print("KERNEL_OK")
</pallas_src>

<mosaic_0001>
module attributes {stable_mosaic.version = 11 : i64} {
  func.func @fused_clf_kernel(%arg0: memref<8x8xi32, #tpu.memory_space<vmem>>, %arg1: memref<8x8xf32, #tpu.memory_space<vmem>>, %arg2: memref<8x64xf32, #tpu.memory_space<vmem>>, %arg3: memref<336x128xf32, #tpu.memory_space<vmem>>, %arg4: memref<8x128xf32, #tpu.memory_space<vmem>>) attributes {dimension_semantics = [], scalar_prefetch = 0 : i64, scratch_operands = 0 : i64, tpu.core_type = #tpu.core_type<tc>} {
    %c0 = arith.constant 0 : index
    %c0_0 = arith.constant 0 : index
    %0 = vector.load %arg1[%c0, %c0_0] : memref<8x8xf32, #tpu.memory_space<vmem>>, vector<8x8xf32>
    %cst = arith.constant dense<0.000000e+00> : vector<8xf32>
    %1 = vector.multi_reduction <add>, %0, %cst [1] : vector<8x8xf32> to vector<8xf32>
    %2 = vector.shape_cast %1 : vector<8xf32> to vector<8x1xf32>
    %cst_1 = arith.constant 1.000000e+00 : f32
    %3 = vector.broadcast %cst_1 : f32 to vector<8x1xf32>
    %4 = arith.maximumf %2, %3 : vector<8x1xf32>
    %5 = vector.broadcast %4 : vector<8x1xf32> to vector<8x8xf32>
    %6 = arith.divf %0, %5 : vector<8x8xf32>
    %c0_2 = arith.constant 0 : index
    %c0_3 = arith.constant 0 : index
    %7 = vector.load %arg0[%c0_2, %c0_3] : memref<8x8xi32, #tpu.memory_space<vmem>>, vector<8x8xi32>
    %8 = tpu.iota {dimensions = array<i32: 2>} : vector<8x8x128xi32>
    %9 = vector.shape_cast %7 : vector<8x8xi32> to vector<8x8x1xi32>
    %10 = vector.broadcast %9 : vector<8x8x1xi32> to vector<8x8x128xi32>
    %11 = arith.cmpi eq, %10, %8 : vector<8x8x128xi32>
    %12 = vector.shape_cast %6 : vector<8x8xf32> to vector<8x8x1xf32>
    %cst_4 = arith.constant 0.000000e+00 : f32
    %13 = vector.shape_cast %12 : vector<8x8x1xf32> to vector<8x8x1xf32>
    %14 = vector.broadcast %13 : vector<8x8x1xf32> to vector<8x8x128xf32>
    %15 = vector.broadcast %cst_4 : f32 to vector<8x8x128xf32>
    %16 = arith.select %11, %14, %15 : vector<8x8x128xi1>, vector<8x8x128xf32>
    %cst_5 = arith.constant dense<0.000000e+00> : vector<8x128xf32>
    %17 = vector.multi_reduction <add>, %16, %cst_5 [1] : vector<8x8x128xf32> to vector<8x128xf32>
    %c0_6 = arith.constant 0 : index
    %c0_7 = arith.constant 0 : index
    %18 = vector.load %arg3[%c0_6, %c0_7] : memref<336x128xf32, #tpu.memory_space<vmem>>, vector<128x128xf32>
    %cst_8 = arith.constant dense<0.000000e+00> : vector<8x128xf32>
    %19 = tpu.matmul %17, %18, %cst_8 {dimension_numbers = #tpu.dot_dimension_numbers<[1], [0], [0], [1], [0, 0, 1, 1], [], []>} : vector<8x128xf32>, vector<128x128xf32>, vector<8x128xf32> -> vector<8x128xf32>
    %20 = math.tanh %19 : vector<8x128xf32>
    %c128 = arith.constant 128 : index
    %c0_9 = arith.constant 0 : index
    %21 = vector.load %arg3[%c128, %c0_9] : memref<336x128xf32, #tpu.memory_space<vmem>>, vector<128x128xf32>
    %c256 = arith.constant 256 : index
    %c0_10 = arith.constant 0 : index
    %22 = vector.load %arg3[%c256, %c0_10] : memref<336x128xf32, #tpu.memory_space<vmem>>, vector<64x128xf32>
    %c320 = arith.constant 320 : index
    %c0_11 = arith.constant 0 : index
    %23 = vector.load %arg3[%c320, %c0_11] : memref<336x128xf32, #tpu.memory_space<vmem>>, vector<1x128xf32>
    %cst_12 = arith.constant dense<0.000000e+00> : vector<8x128xf32>
    %24 = tpu.matmul %20, %21, %cst_12 {dimension_numbers = #tpu.dot_dimension_numbers<[1], [0], [0], [1], [0, 0, 1, 1], [], []>} : vector<8x128xf32>, vector<128x128xf32>, vector<8x128xf32> -> vector<8x128xf32>
    %c0_13 = arith.constant 0 : index
    %c0_14 = arith.constant 0 : index
    %25 = vector.load %arg2[%c0_13, %c0_14] : memref<8x64xf32, #tpu.memory_space<vmem>>, vector<8x64xf32>
    %cst_15 = arith.constant dense<0.000000e+00> : vector<8x128xf32>
    %26 = tpu.matmul %25, %22, %cst_15 {dimension_numbers = #tpu.dot_dimension_numbers<[1], [0], [0], [1], [0, 0, 1, 1], [], []>} : vector<8x64xf32>, vector<64x128xf32>, vector<8x128xf32> -> vector<8x128xf32>
    %27 = arith.addf %24, %26 : vector<8x128xf32>
    %28 = vector.broadcast %23 : vector<1x128xf32> to vector<8x128xf32>
    %29 = arith.addf %27, %28 : vector<8x128xf32>
    %c0_16 = arith.constant 0 : index
    %c0_17 = arith.constant 0 : index
    %30 = vector.load %arg4[%c0_16, %c0_17] : memref<8x128xf32, #tpu.memory_space<vmem>>, vector<8x128xf32>
    tpu.vector_store %arg4[%c0_16, %c0_17], %29 {strides = array<i32>} : memref<8x128xf32, #tpu.memory_space<vmem>>, vector<8x128xf32>,
    return
  }
}

</mosaic_0001>

<llo_original>
// kernel: multimodal_concat_bert_clf.1
$region0: #{multimodal_concat_bert_clf.1}
  #allocation0 [shape = 'u32[]', space=smem, size = 0x4, offset = 0x4, fixed_abs, tag = 'smem constant byte address 0x4 - core index']
  #allocation1 [shape = 'u32[144,128]{1,0:T(1,128)}', space=vmem, size = 0x12000, scoped, tag = 'internal scratch']
  %s0 = inlined_call_operand.vmem [shape: s32[8,8], index: 0, kind: input, shape index: {}]
  %s1 = inlined_call_operand.vmem [shape: f32[8,8], index: 1, kind: input, shape index: {}]
  %s2 = inlined_call_operand.vmem [shape: f32[8,64], index: 2, kind: input, shape index: {}]
  %s3 = inlined_call_operand.hbm [shape: f32[336,128], index: 3, kind: input, shape index: {}]
  %s4 = inlined_call_operand.vmem [shape: f32[8,128], index: 4, kind: output, shape index: {}]
  %s5 = sld [smem:[#allocation0]]
  $region30: #{multimodal_concat_bert_clf.1} parent=0
    _
  %s7 = ssub.s32 1, %s5
  %s8 = scalar_select 0, %s7, %s5
  $region1: #{multimodal_concat_bert_clf.1} parent=0
    #allocation2 [shape = 'u8[172032]{0}', space=vmem, size = 0x2a000, scoped, tag = 'input window, operand 3, single buffered']
    #allocation3 [shape = 's32[1]{0}', space=sflag, size = 0x4, scoped, tag = 'scoped memory for multimodal_concat_bert_clf.1']
    %9 = vsyncpa [#allocation3], 0
    // Predicated region
    $region2: #{multimodal_concat_bert_clf.1} parent=1 // pred_check
      _
    $region3: #{multimodal_concat_bert_clf.1} parent=1 // pred_check_branch
      %11 = sbr.rel (0) target = $region5
    $region4: #{multimodal_concat_bert_clf.1} parent=1 // pred_region
      _
    $region5: #{multimodal_concat_bert_clf.1} parent=1 // pred_fallthru
      _
    // Predicated region
    $region6: #{multimodal_concat_bert_clf.1} parent=1 // pred_check
      _
    $region7: #{multimodal_concat_bert_clf.1} parent=1 // pred_check_branch
      %13 = sbr.rel (0) target = $region9
    $region8: #{multimodal_concat_bert_clf.1} parent=1 // pred_region
      _
    $region9: #{multimodal_concat_bert_clf.1} parent=1 // pred_fallthru
      _
    // Predicated region
    $region10: #{multimodal_concat_bert_clf.1} parent=1 // pred_check
      _
    $region11: #{multimodal_concat_bert_clf.1} parent=1 // pred_check_branch
      %15 = sbr.rel (0) target = $region13
    $region12: #{multimodal_concat_bert_clf.1} parent=1 // pred_region
      _
    $region13: #{multimodal_concat_bert_clf.1} parent=1 // pred_fallthru
      _
    // Predicated region
    $region14: #{multimodal_concat_bert_clf.1} parent=1 // pred_check
      _
    $region15: #{multimodal_concat_bert_clf.1} parent=1 // pred_check_branch
      %17 = sbr.rel (0) target = $region17
    $region16: #{multimodal_concat_bert_clf.1} parent=1 // pred_region
      %s19 = ssub.s32 5376, 5376
      %20 = vsyncadd [#allocation3], %s19
      %s21 = sshll.u32 [#allocation2], 4
      %s22 = int_to_ptr.vmem [resolvable:$true] %s21
      %27 = dma.hbm_to_vmem [thread:$0]  %s3, 5376, %s22, [#allocation3], 128, 128, 8
    $region17: #{multimodal_concat_bert_clf.1} parent=1 // pred_fallthru
      _
    // Predicated region
    $region18: #{multimodal_concat_bert_clf.1} parent=1 // pred_check
      _
    $region19: #{multimodal_concat_bert_clf.1} parent=1 // pred_check_branch
      %29 = sbr.rel (0) target = $region21
    $region20: #{multimodal_concat_bert_clf.1} parent=1 // pred_region
      %30 = dma.done [#allocation3], 5376
    $region21: #{multimodal_concat_bert_clf.1} parent=1 // pred_fallthru
      _
    %v31 = vld [vmem:[%s1] sm:$0xff]
    %vm32 = vcmask 64512
    %v33 = vsel %vm32, %v31, 0.0
    %34 = vadd.xlane.f32.xlu0 %v33
    %v35 = vpop.xlane.xlu0 %34
    %v36 = vmax.f32 %v35, 1.0
    %v37 = vrcp.pop %v36
    %v38 = vmul.f32 %v31, %v37
    %v39 = vld [vmem:[%s0] sm:$0xff]
    %v40 = vlaneseq
    %v41 = vand.u32 %v40, 127
    %v42 = vlaneseq
    %v43 = vshrl.u32 %v42, 7
    %v44 = vsub.s32 0, %v43
    %v45 = vrot.slane %v39, %v44
    %47 = vbcast.lane.b32.xlu0 %v45, 256
    %v48 = vpop.permute.xlu0 %47
    %v49 = vlaneseq
    %v50 = vshrl.u32 %v49, 7
    %v51 = vsub.s32 1, %v50
    %v52 = vrot.slane %v39, %v51
    %54 = vbcast.lane.b32.xlu0 %v52, 256
    %v55 = vpop.permute.xlu0 %54
    %v56 = vlaneseq
    %v57 = vshrl.u32 %v56, 7
    %v58 = vsub.s32 2, %v57
    %v59 = vrot.slane %v39, %v58
    %61 = vbcast.lane.b32.xlu0 %v59, 256
    %v62 = vpop.permute.xlu0 %61
    %v63 = vlaneseq
    %v64 = vshrl.u32 %v63, 7
    %v65 = vsub.s32 3, %v64
    %v66 = vrot.slane %v39, %v65
    %68 = vbcast.lane.b32.xlu0 %v66, 256
    %v69 = vpop.permute.xlu0 %68
    %v70 = vlaneseq
    %v71 = vshrl.u32 %v70, 7
    %v72 = vsub.s32 4, %v71
    %v73 = vrot.slane %v39, %v72
    %75 = vbcast.lane.b32.xlu0 %v73, 256
    %v76 = vpop.permute.xlu0 %75
    %v77 = vlaneseq
    %v78 = vshrl.u32 %v77, 7
    %v79 = vsub.s32 5, %v78
    %v80 = vrot.slane %v39, %v79
    %82 = vbcast.lane.b32.xlu0 %v80, 256
    %v83 = vpop.permute.xlu0 %82
    %v84 = vlaneseq
    %v85 = vshrl.u32 %v84, 7
    %v86 = vsub.s32 6, %v85
    %v87 = vrot.slane %v39, %v86
    %89 = vbcast.lane.b32.xlu0 %v87, 256
    %v90 = vpop.permute.xlu0 %89
    %v91 = vlaneseq
    %v92 = vshrl.u32 %v91, 7
    %v93 = vsub.s32 7, %v92
    %v94 = vrot.slane %v39, %v93
    %96 = vbcast.lane.b32.xlu0 %v94, 256
    %v97 = vpop.permute.xlu0 %96
    %vm98 = vcmp.eq.s32.totalorder %v48, %v41
    %vm99 = vcmp.eq.s32.totalorder %v55, %v41
    %vm100 = vcmp.eq.s32.totalorder %v62, %v41
    %vm101 = vcmp.eq.s32.totalorder %v69, %v41
    %vm102 = vcmp.eq.s32.totalorder %v76, %v41
    %vm103 = vcmp.eq.s32.totalorder %v83, %v41
    %vm104 = vcmp.eq.s32.totalorder %v90, %v41
    %vm105 = vcmp.eq.s32.totalorder %v97, %v41
    %v106 = vlaneseq
    %v107 = vshrl.u32 %v106, 7
    %v108 = vsub.s32 0, %v107
    %v109 = vrot.slane %v38, %v108
    %111 = vbcast.lane.b32.xlu0 %v109, 256
    %v112 = vpop.permute.xlu0 %111
    %v113 = vlaneseq
    %v114 = vshrl.u32 %v113, 7
    %v115 = vsub.s32 1, %v114
    %v116 = vrot.slane %v38, %v115
    %118 = vbcast.lane.b32.xlu0 %v116, 256
    %v119 = vpop.permute.xlu0 %118
    %v120 = vlaneseq
    %v121 = vshrl.u32 %v120, 7
    %v122 = vsub.s32 2, %v121
    %v123 = vrot.slane %v38, %v122
    %125 = vbcast.lane.b32.xlu0 %v123, 256
    %v126 = vpop.permute.xlu0 %125
    %v127 = vlaneseq
    %v128 = vshrl.u32 %v127, 7
    %v129 = vsub.s32 3, %v128
    %v130 = vrot.slane %v38, %v129
    %132 = vbcast.lane.b32.xlu0 %v130, 256
    %v133 = vpop.permute.xlu0 %132
    %v134 = vlaneseq
    %v135 = vshrl.u32 %v134, 7
    %v136 = vsub.s32 4, %v135
    %v137 = vrot.slane %v38, %v136
    %139 = vbcast.lane.b32.xlu0 %v137, 256
    %v140 = vpop.permute.xlu0 %139
    %v141 = vlaneseq
    %v142 = vshrl.u32 %v141, 7
    %v143 = vsub.s32 5, %v142
    %v144 = vrot.slane %v38, %v143
    %146 = vbcast.lane.b32.xlu0 %v144, 256
    %v147 = vpop.permute.xlu0 %146
    %v148 = vlaneseq
    %v149 = vshrl.u32 %v148, 7
    %v150 = vsub.s32 6, %v149
    %v151 = vrot.slane %v38, %v150
    %153 = vbcast.lane.b32.xlu0 %v151, 256
    %v154 = vpop.permute.xlu0 %153
    %v155 = vlaneseq
    %v156 = vshrl.u32 %v155, 7
    %v157 = vsub.s32 7, %v156
    %v158 = vrot.slane %v38, %v157
    %160 = vbcast.lane.b32.xlu0 %v158, 256
    %v161 = vpop.permute.xlu0 %160
    %v162 = vsel %vm98, %v112, 0.0
    %v163 = vsel %vm99, %v119, 0.0
    %v164 = vsel %vm100, %v126, 0.0
    %v165 = vsel %vm101, %v133, 0.0
    %v166 = vsel %vm102, %v140, 0.0
    %v167 = vsel %vm103, %v147, 0.0
    %v168 = vsel %vm104, %v154, 0.0
    %v169 = vsel %vm105, %v161, 0.0
    %v170 = vrot.slane %v162, 4
    %v171 = vadd.f32 %v162, %v170
    %v172 = vrot.slane %v171, 2
    %v173 = vadd.f32 %v171, %v172
    %v174 = vrot.slane %v173, 1
    %v175 = vadd.f32 %v173, %v174
    %v176 = vrot.slane %v163, 4
    %v177 = vadd.f32 %v163, %v176
    %v178 = vrot.slane %v177, 2
    %v179 = vadd.f32 %v177, %v178
    %v180 = vrot.slane %v179, 1
    %v181 = vadd.f32 %v179, %v180
    %v182 = vrot.slane %v164, 4
    %v183 = vadd.f32 %v164, %v182
    %v184 = vrot.slane %v183, 2
    %v185 = vadd.f32 %v183, %v184
    %v186 = vrot.slane %v185, 1
    %v187 = vadd.f32 %v185, %v186
    %v188 = vrot.slane %v165, 4
    %v189 = vadd.f32 %v165, %v188
    %v190 = vrot.slane %v189, 2
    %v191 = vadd.f32 %v189, %v190
    %v192 = vrot.slane %v191, 1
    %v193 = vadd.f32 %v191, %v192
    %v194 = vrot.slane %v166, 4
    %v195 = vadd.f32 %v166, %v194
    %v196 = vrot.slane %v195, 2
    %v197 = vadd.f32 %v195, %v196
    %v198 = vrot.slane %v197, 1
    %v199 = vadd.f32 %v197, %v198
    %v200 = vrot.slane %v167, 4
    %v201 = vadd.f32 %v167, %v200
    %v202 = vrot.slane %v201, 2
    %v203 = vadd.f32 %v201, %v202
    %v204 = vrot.slane %v203, 1
    %v205 = vadd.f32 %v203, %v204
    %v206 = vrot.slane %v168, 4
    %v207 = vadd.f32 %v168, %v206
    %v208 = vrot.slane %v207, 2
    %v209 = vadd.f32 %v207, %v208
    %v210 = vrot.slane %v209, 1
    %v211 = vadd.f32 %v209, %v210
    %v212 = vrot.slane %v169, 4
    %v213 = vadd.f32 %v169, %v212
    %v214 = vrot.slane %v213, 2
    %v215 = vadd.f32 %v213, %v214
    %v216 = vrot.slane %v215, 1
    %v217 = vadd.f32 %v215, %v216
    %v218 = vld [vmem:[#allocation2] sm:$0xff]
    %v219 = vld [vmem:[#allocation2 + $0x8] sm:$0xff]
    %v220 = vld [vmem:[#allocation2 + $0x10] sm:$0xff]
    %v221 = vld [vmem:[#allocation2 + $0x18] sm:$0xff]
    %v222 = vld [vmem:[#allocation2 + $0x20] sm:$0xff]
    %v223 = vld [vmem:[#allocation2 + $0x28] sm:$0xff]
    %v224 = vld [vmem:[#allocation2 + $0x30] sm:$0xff]
    %v225 = vld [vmem:[#allocation2 + $0x38] sm:$0xff]
    %v226 = vld [vmem:[#allocation2 + $0x40] sm:$0xff]
    %v227 = vld [vmem:[#allocation2 + $0x48] sm:$0xff]
    %v228 = vld [vmem:[#allocation2 + $0x50] sm:$0xff]
    %v229 = vld [vmem:[#allocation2 + $0x58] sm:$0xff]
    %v230 = vld [vmem:[#allocation2 + $0x60] sm:$0xff]
    %v231 = vld [vmem:[#allocation2 + $0x68] sm:$0xff]
    %v232 = vld [vmem:[#allocation2 + $0x70] sm:$0xff]
    %v233 = vld [vmem:[#allocation2 + $0x78] sm:$0xff]
    %vm242 = vcmask 1041409
    %v243 = vsel %vm242, %v181, %v175
    %vm244 = vcmask 1042434
    %v245 = vsel %vm244, %v187, %v243
    %vm246 = vcmask 1043459
    %v247 = vsel %vm246, %v193, %v245
    %vm248 = vcmask 1044484
    %v249 = vsel %vm248, %v199, %v247
    %vm250 = vcmask 1045509
    %v251 = vsel %vm250, %v205, %v249
    %vm252 = vcmask 1046534
    %v253 = vsel %vm252, %v211, %v251
    %vm254 = vcmask 1047559
    %v255 = vsel %vm254, %v217, %v253
    %257 = vmatprep.subr.mxu0 0.0
    %258 = vmatpush1.msra.mxu0 %v218
    %259 = vmatprep.subr.mxu0 0.0
    %260 = vmatpush1.msra.mxu0 %v219
    %261 = vmatprep.subr.mxu0 0.0
    %262 = vmatpush1.msra.mxu0 %v220
    %263 = vmatprep.subr.mxu0 0.0
    %264 = vmatpush1.msra.mxu0 %v221
    %265 = vmatprep.subr.mxu0 0.0
    %266 = vmatpush1.msra.mxu0 %v222
    %267 = vmatprep.subr.mxu0 0.0
    %268 = vmatpush1.msra.mxu0 %v223
    %269 = vmatprep.subr.mxu0 0.0
    %270 = vmatpush1.msra.mxu0 %v224
    %271 = vmatprep.subr.mxu0 0.0
    %272 = vmatpush1.msra.mxu0 %v225
    %273 = vmatprep.subr.mxu0 0.0
    %274 = vmatpush1.msra.mxu0 %v226
    %275 = vmatprep.subr.mxu0 0.0
    %276 = vmatpush1.msra.mxu0 %v227
    %277 = vmatprep.subr.mxu0 0.0
    %278 = vmatpush1.msra.mxu0 %v228
    %279 = vmatprep.subr.mxu0 0.0
    %280 = vmatpush1.msra.mxu0 %v229
    %281 = vmatprep.subr.mxu0 0.0
    %282 = vmatpush1.msra.mxu0 %v230
    %283 = vmatprep.subr.mxu0 0.0
    %284 = vmatpush1.msra.mxu0 %v231
    %285 = vmatprep.subr.mxu0 0.0
    %286 = vmatpush1.msra.mxu0 %v232
    %287 = vmatprep.subr.mxu0 0.0
    %288 = vmatpush1.msra.mxu0 %v233
    %289 = vmatprep.subr.mxu0 0.0
    %290 = vmatpush1.msra.mxu0 0.0
    %291 = vmatprep.subr.mxu0 0.0
    %292 = vmatpush1.msra.mxu0 0.0
    %293 = vmatprep.subr.mxu0 0.0
    %294 = vmatpush1.msra.mxu0 0.0
    %295 = vmatprep.subr.mxu0 0.0
    %296 = vmatpush1.msra.mxu0 0.0
    %297 = vmatprep.subr.mxu0 0.0
    %298 = vmatpush1.msra.mxu0 0.0
    %299 = vmatprep.subr.mxu0 0.0
    %300 = vmatpush1.msra.mxu0 0.0
    %301 = vmatprep.subr.mxu0 0.0
    %302 = vmatpush1.msra.mxu0 0.0
    %303 = vmatprep.subr.mxu0 0.0
    %304 = vmatpush1.msra.mxu0 0.0
    %305 = vmatprep.subr.mxu0 0.0
    %306 = vmatpush1.msra.mxu0 0.0
    %307 = vmatprep.subr.mxu0 0.0
    %308 = vmatpush1.msra.mxu0 0.0
    %309 = vmatprep.subr.mxu0 0.0
    %310 = vmatpush1.msra.mxu0 0.0
    %311 = vmatprep.subr.mxu0 0.0
    %312 = vmatpush1.msra.mxu0 0.0
    %313 = vmatprep.subr.mxu0 0.0
    %314 = vmatpush1.msra.mxu0 0.0
    %315 = vmatprep.subr.mxu0 0.0
    %316 = vmatpush1.msra.mxu0 0.0
    %317 = vmatprep.subr.mxu0 0.0
    %318 = vmatpush1.msra.mxu0 0.0
    %319 = vmatprep.subr.mxu0 0.0
    %320 = vmatpush1.msra.mxu0 0.0
    %321 = vmatprep.mubr.f32.mxu0 0.0
    %322 = vmatmul.mubr.f32.gmra.mrb[0].mxu0 %v255
    %v323 = vpop.f32.mrb[0].mxu0
    %v324 = vadd.f32 0.0, %v323
    %v325 = vpop.f32.mrb[0].mxu0
    %326 = vdwg.mxu0
    %v327 = vtanh.pop %v324
    %v328 = vld [vmem:[#allocation2 + $0x80] sm:$0xff]
    %v329 = vld [vmem:[#allocation2 + $0x88] sm:$0xff]
    %v330 = vld [vmem:[#allocation2 + $0x90] sm:$0xff]
    %v331 = vld [vmem:[#allocation2 + $0x98] sm:$0xff]
    %v332 = vld [vmem:[#allocation2 + $0xa0] sm:$0xff]
    %v333 = vld [vmem:[#allocation2 + $0xa8] sm:$0xff]
    %v334 = vld [vmem:[#allocation2 + $0xb0] sm:$0xff]
    %v335 = vld [vmem:[#allocation2 + $0xb8] sm:$0xff]
    %v336 = vld [vmem:[#allocation2 + $0xc0] sm:$0xff]
    %v337 = vld [vmem:[#allocation2 + $0xc8] sm:$0xff]
    %v338 = vld [vmem:[#allocation2 + $0xd0] sm:$0xff]
    %v339 = vld [vmem:[#allocation2 + $0xd8] sm:$0xff]
    %v340 = vld [vmem:[#allocation2 + $0xe0] sm:$0xff]
    %v341 = vld [vmem:[#allocation2 + $0xe8] sm:$0xff]
    %v342 = vld [vmem:[#allocation2 + $0xf0] sm:$0xff]
    %v343 = vld [vmem:[#allocation2 + $0xf8] sm:$0xff]
    %v344 = vld [vmem:[#allocation2 + $0x100] sm:$0xff]
    %v345 = vld [vmem:[#allocation2 + $0x108] sm:$0xff]
    %v346 = vld [vmem:[#allocation2 + $0x110] sm:$0xff]
    %v347 = vld [vmem:[#allocation2 + $0x118] sm:$0xff]
    %v348 = vld [vmem:[#allocation2 + $0x120] sm:$0xff]
    %v349 = vld [vmem:[#allocation2 + $0x128] sm:$0xff]
    %v350 = vld [vmem:[#allocation2 + $0x130] sm:$0xff]
    %v351 = vld [vmem:[#allocation2 + $0x138] sm:$0xff]
    %v352 = vld [vmem:[#allocation2 + $0x140] sm:$0x1]
    %v353 = vld [vmem:[%s2] sm:$0xff]
    %vm354 = vcmask 523264
    %v356 = vsel %vm354, %v353, 0
    %358 = vmatprep.subr.mxu0 0.0
    %359 = vmatpush1.msra.mxu0 %v344
    %360 = vmatprep.subr.mxu0 0.0
    %361 = vmatpush1.msra.mxu0 %v345
    %362 = vmatprep.subr.mxu0 0.0
    %363 = vmatpush1.msra.mxu0 %v346
    %364 = vmatprep.subr.mxu0 0.0
    %365 = vmatpush1.msra.mxu0 %v347
    %366 = vmatprep.subr.mxu0 0.0
    %367 = vmatpush1.msra.mxu0 %v348
    %368 = vmatprep.subr.mxu0 0.0
    %369 = vmatpush1.msra.mxu0 %v349
    %370 = vmatprep.subr.mxu0 0.0
    %371 = vmatpush1.msra.mxu0 %v350
    %372 = vmatprep.subr.mxu0 0.0
    %373 = vmatpush1.msra.mxu0 %v351
    %374 = vmatprep.subr.mxu0 0.0
    %375 = vmatpush1.msra.mxu0 0.0
    %376 = vmatprep.subr.mxu0 0.0
    %377 = vmatpush1.msra.mxu0 0.0
    %378 = vmatprep.subr.mxu0 0.0
    %379 = vmatpush1.msra.mxu0 0.0
    %380 = vmatprep.subr.mxu0 0.0
    %381 = vmatpush1.msra.mxu0 0.0
    %382 = vmatprep.subr.mxu0 0.0
    %383 = vmatpush1.msra.mxu0 0.0
    %384 = vmatprep.subr.mxu0 0.0
    %385 = vmatpush1.msra.mxu0 0.0
    %386 = vmatprep.subr.mxu0 0.0
    %387 = vmatpush1.msra.mxu0 0.0
    %388 = vmatprep.subr.mxu0 0.0
    %389 = vmatpush1.msra.mxu0 0.0
    %390 = vmatprep.subr.mxu0 0.0
    %391 = vmatpush1.msra.mxu0 0.0
    %392 = vmatprep.subr.mxu0 0.0
    %393 = vmatpush1.msra.mxu0 0.0
    %394 = vmatprep.subr.mxu0 0.0
    %395 = vmatpush1.msra.mxu0 0.0
    %396 = vmatprep.subr.mxu0 0.0
    %397 = vmatpush1.msra.mxu0 0.0
    %398 = vmatprep.subr.mxu0 0.0
    %399 = vmatpush1.msra.mxu0 0.0
    %400 = vmatprep.subr.mxu0 0.0
    %401 = vmatpush1.msra.mxu0 0.0
    %402 = vmatprep.subr.mxu0 0.0
    %403 = vmatpush1.msra.mxu0 0.0
    %404 = vmatprep.subr.mxu0 0.0
    %405 = vmatpush1.msra.mxu0 0.0
    %406 = vmatprep.subr.mxu0 0.0
    %407 = vmatpush1.msra.mxu0 0.0
    %408 = vmatprep.subr.mxu0 0.0
    %409 = vmatpush1.msra.mxu0 0.0
    %410 = vmatprep.subr.mxu0 0.0
    %411 = vmatpush1.msra.mxu0 0.0
    %412 = vmatprep.subr.mxu0 0.0
    %413 = vmatpush1.msra.mxu0 0.0
    %414 = vmatprep.subr.mxu0 0.0
    %415 = vmatpush1.msra.mxu0 0.0
    %416 = vmatprep.subr.mxu0 0.0
    %417 = vmatpush1.msra.mxu0 0.0
    %418 = vmatprep.subr.mxu0 0.0
    %419 = vmatpush1.msra.mxu0 0.0
    %420 = vmatprep.subr.mxu0 0.0
    %421 = vmatpush1.msra.mxu0 0.0
    %422 = vmatprep.mubr.f32.mxu0 0.0
    %423 = vmatmul.mubr.f32.gmra.mrb[0].mxu0 %v356
    %v424 = vpop.f32.mrb[0].mxu0
    %v425 = vadd.f32 0.0, %v424
    %v426 = vpop.f32.mrb[0].mxu0
    %427 = vdwg.mxu0
    %428 = vmatprep.subr.mxu0 0.0
    %429 = vmatpush1.msra.mxu0 %v328
    %430 = vmatprep.subr.mxu0 0.0
    %431 = vmatpush1.msra.mxu0 %v329
    %432 = vmatprep.subr.mxu0 0.0
    %433 = vmatpush1.msra.mxu0 %v330
    %434 = vmatprep.subr.mxu0 0.0
    %435 = vmatpush1.msra.mxu0 %v331
    %436 = vmatprep.subr.mxu0 0.0
    %437 = vmatpush1.msra.mxu0 %v332
    %438 = vmatprep.subr.mxu0 0.0
    %439 = vmatpush1.msra.mxu0 %v333
    %440 = vmatprep.subr.mxu0 0.0
    %441 = vmatpush1.msra.mxu0 %v334
    %442 = vmatprep.subr.mxu0 0.0
    %443 = vmatpush1.msra.mxu0 %v335
    %444 = vmatprep.subr.mxu0 0.0
    %445 = vmatpush1.msra.mxu0 %v336
    %446 = vmatprep.subr.mxu0 0.0
    %447 = vmatpush1.msra.mxu0 %v337
    %448 = vmatprep.subr.mxu0 0.0
    %449 = vmatpush1.msra.mxu0 %v338
    %450 = vmatprep.subr.mxu0 0.0
    %451 = vmatpush1.msra.mxu0 %v339
    %452 = vmatprep.subr.mxu0 0.0
    %453 = vmatpush1.msra.mxu0 %v340
    %454 = vmatprep.subr.mxu0 0.0
    %455 = vmatpush1.msra.mxu0 %v341
    %456 = vmatprep.subr.mxu0 0.0
    %457 = vmatpush1.msra.mxu0 %v342
    %458 = vmatprep.subr.mxu0 0.0
    %459 = vmatpush1.msra.mxu0 %v343
    %460 = vmatprep.subr.mxu0 0.0
    %461 = vmatpush1.msra.mxu0 0.0
    %462 = vmatprep.subr.mxu0 0.0
    %463 = vmatpush1.msra.mxu0 0.0
    %464 = vmatprep.subr.mxu0 0.0
    %465 = vmatpush1.msra.mxu0 0.0
    %466 = vmatprep.subr.mxu0 0.0
    %467 = vmatpush1.msra.mxu0 0.0
    %468 = vmatprep.subr.mxu0 0.0
    %469 = vmatpush1.msra.mxu0 0.0
    %470 = vmatprep.subr.mxu0 0.0
    %471 = vmatpush1.msra.mxu0 0.0
    %472 = vmatprep.subr.mxu0 0.0
    %473 = vmatpush1.msra.mxu0 0.0
    %474 = vmatprep.subr.mxu0 0.0
    %475 = vmatpush1.msra.mxu0 0.0
    %476 = vmatprep.subr.mxu0 0.0
    %477 = vmatpush1.msra.mxu0 0.0
    %478 = vmatprep.subr.mxu0 0.0
    %479 = vmatpush1.msra.mxu0 0.0
    %480 = vmatprep.subr.mxu0 0.0
    %481 = vmatpush1.msra.mxu0 0.0
    %482 = vmatprep.subr.mxu0 0.0
    %483 = vmatpush1.msra.mxu0 0.0
    %484 = vmatprep.subr.mxu0 0.0
    %485 = vmatpush1.msra.mxu0 0.0
    %486 = vmatprep.subr.mxu0 0.0
    %487 = vmatpush1.msra.mxu0 0.0
    %488 = vmatprep.subr.mxu0 0.0
    %489 = vmatpush1.msra.mxu0 0.0
    %490 = vmatprep.subr.mxu0 0.0
    %491 = vmatpush1.msra.mxu0 0.0
    %492 = vmatprep.mubr.f32.mxu0 0.0
    %493 = vmatmul.mubr.f32.gmra.mrb[0].mxu0 %v327
    %v494 = vpop.f32.mrb[0].mxu0
    %v495 = vadd.f32 %v425, %v494
    %v496 = vpop.f32.mrb[0].mxu0
    %497 = vdwg.mxu0
    %v498 = vlaneseq
    %v499 = vshrl.u32 %v498, 7
    %v500 = vsub.s32 0, %v499
    %v501 = vrot.slane %v352, %v500
    %v502 = vadd.f32 %v495, %v501
    %503 = vst [vmem:[%s4] sm:$0xff] %v502
    // Predicated region
    $region22: #{multimodal_concat_bert_clf.1} parent=1 // pred_check
      _
    $region23: #{multimodal_concat_bert_clf.1} parent=1 // pred_check_branch
      %505 = sbr.rel (0) target = $region25
    $region24: #{multimodal_concat_bert_clf.1} parent=1 // pred_region
      _
    $region25: #{multimodal_concat_bert_clf.1} parent=1 // pred_fallthru
      _
    // Predicated region
    $region26: #{multimodal_concat_bert_clf.1} parent=1 // pred_check
      _
    $region27: #{multimodal_concat_bert_clf.1} parent=1 // pred_check_branch
      %507 = sbr.rel (0) target = $region29
    $region28: #{multimodal_concat_bert_clf.1} parent=1 // pred_region
      _
    $region29: #{multimodal_concat_bert_clf.1} parent=1 // pred_fallthru
      _
    %508 = vsyncpa [#allocation3], 1

</llo_original>
